<compile_context>
chip_gen: v6e
topology: v6e:2x2x1
jax: 0.10.0
libtpu: 0.0.40
codegen_flags: <defaults>
</compile_context>

<pallas_src>
import functools

import jax
import jax.numpy as jnp
from jax import lax
from jax.experimental import pallas as pl
from jax.experimental.pallas import tpu as pltpu


def _gem_kernel(p_ref, x_ref, o_ref, acc_ref, *, eps, inv_l, l_total, tile_l,
                need_mask, p_static):
    # p_ref:   SMEM (1,) learnable exponent (read once per step; may be unused
    #          when p_static is given)
    # x_ref:   VMEM (TILE_N, C, TILE_L) input slab
    # o_ref:   VMEM (TILE_N, C) lane-dense output block (revisited across L axis)
    # acc_ref: VMEM (TILE_N, C) f32 partial-sum accumulator
    l_idx = pl.program_id(1)

    @pl.when(l_idx == 0)
    def _():
        acc_ref[...] = jnp.zeros_like(acc_ref)

    x = x_ref[...].astype(jnp.float32)
    xc = jnp.maximum(x, eps)                # clamp(min=eps) keeps log() legal

    if p_static is not None and float(p_static) == int(p_static) and int(p_static) >= 1:
        # Static integer exponent: pure VPU multiplies, EUP slot stays free.
        xp = lax.integer_pow(xc, int(p_static))
    else:
        p = p_ref[0] if p_static is None else jnp.float32(p_static)
        xp = jnp.exp(p * jnp.log(xc))       # x**p, exact since x >= eps > 0

    if need_mask:
        # Ragged last L block: zero out padded lanes before accumulating.
        lane = lax.broadcasted_iota(jnp.int32, xp.shape, 2)
        xp = jnp.where(l_idx * tile_l + lane < l_total, xp, 0.0)

    acc_ref[...] += jnp.sum(xp, axis=-1)    # cross-lane reduce (XLU)

    @pl.when(l_idx == pl.num_programs(1) - 1)
    def _():
        m = acc_ref[...] * inv_l            # mean over L
        if p_static is None:
            inv_p = 1.0 / p_ref[0]          # one scalar reciprocal per step
        else:
            inv_p = 1.0 / float(p_static)
        o_ref[...] = jnp.exp(jnp.log(m) * inv_p).astype(o_ref.dtype)


def _choose_tiles(n, c, l, itemsize, target_bytes=1 << 20):
    """Pick (TILE_N, TILE_L): ~1 MiB per input buffer, (8,128)-rule compliant."""
    row_bytes = c * l * itemsize
    if row_bytes <= target_bytes:
        tn = target_bytes // row_bytes
        if tn >= n:
            tn = n                          # full batch fits -> single N block
        else:
            tn = max(8, (tn // 8) * 8)      # keep output second-minor aligned
            tn = min(tn, n)
        return tn, l
    # One sample already exceeds the target: keep TILE_N minimal and split L
    # onto the trailing "arbitrary" grid axis (f32 accumulator in scratch).
    tn = n if n <= 8 else 8
    tl = (target_bytes // (tn * c * itemsize)) // 128 * 128
    tl = max(128, tl)
    if tl >= l:
        tl = l
    return tn, tl


def gem(x, p, eps=1e-6, p_static=None, tile_n=None, tile_l=None):
    """x: (N, C, L) float array, p: (1,) float32 parameter. Returns (N, C, 1)."""
    n, c, l = x.shape
    itemsize = x.dtype.itemsize
    auto_tn, auto_tl = _choose_tiles(n, c, l, itemsize)
    tn = auto_tn if tile_n is None else tile_n
    tl = auto_tl if tile_l is None else tile_l

    grid = (pl.cdiv(n, tn), pl.cdiv(l, tl))
    need_mask = (l % tl) != 0

    kernel = functools.partial(
        _gem_kernel, eps=float(eps), inv_l=1.0 / l, l_total=l, tile_l=tl,
        need_mask=need_mask, p_static=p_static)

    # Double-buffered input slabs + lane-dense output + accumulator, with headroom.
    in_block = tn * c * tl * itemsize
    out_block = tn * c * (itemsize + 4)
    vmem_limit = int(min(100 * (1 << 20),
                         max(32 * (1 << 20), 4 * in_block + 4 * out_block + (2 << 20))))

    out2d = pl.pallas_call(
        kernel,
        out_shape=jax.ShapeDtypeStruct((n, c), x.dtype),
        grid=grid,
        in_specs=[
            pl.BlockSpec(memory_space=pltpu.SMEM),             # p (scalar, resident)
            pl.BlockSpec((tn, c, tl), lambda i, j: (i, 0, j)),  # ~1 MiB x slab
        ],
        out_specs=pl.BlockSpec((tn, c), lambda i, j: (i, 0)),   # lane-dense output
        scratch_shapes=[pltpu.VMEM((tn, c), jnp.float32)],      # partial sums
        compiler_params=pltpu.CompilerParams(
            dimension_semantics=("parallel", "arbitrary"),
            vmem_limit_bytes=vmem_limit),
    )(p, x)
    return out2d[:, :, None]


def gem_ref(x, p, eps=1e-6):
    xc = jnp.maximum(x, eps)
    m = jnp.mean(xc ** p[0], axis=-1, keepdims=True)
    return m ** (1.0 / p[0])


if __name__ == "__main__":
    key = jax.random.PRNGKey(0)
    k1, k2, k3 = jax.random.split(key, 3)

    # Deterministic parameter init, matching nn.Parameter(torch.ones(1) * 3)
    p = jnp.ones((1,), dtype=jnp.float32) * 3.0

    # Case 1: typical GeM input (batch, channels, flattened 7x7 spatial).
    x1 = jax.random.normal(k1, (4, 16, 49), dtype=jnp.float32)
    out1 = jax.block_until_ready(gem(x1, p))
    assert out1.shape == (4, 16, 1), out1.shape
    assert jnp.allclose(out1, gem_ref(x1, p), rtol=1e-5, atol=1e-6)

    # Case 2: exercises the N-tiled + L-split accumulator path (grid 2x3).
    x2 = jax.random.normal(k2, (16, 8, 384), dtype=jnp.float32)
    out2 = jax.block_until_ready(gem(x2, p, tile_n=8, tile_l=128))
    assert jnp.allclose(out2, gem_ref(x2, p), rtol=1e-5, atol=1e-6)

    # Case 3: exercises the ragged (masked) last L block.
    x3 = jax.random.normal(k3, (4, 8, 200), dtype=jnp.float32)
    out3 = jax.block_until_ready(gem(x3, p, tile_l=128))
    assert jnp.allclose(out3, gem_ref(x3, p), rtol=1e-5, atol=1e-6)

    # Case 4: static-p fast path (VPU integer pow instead of EUP exp/log).
    out4 = jax.block_until_ready(gem(x1, p, p_static=3))
    assert jnp.allclose(out4, gem_ref(x1, p), rtol=1e-5, atol=1e-6)

    print("KERNEL_OK")
</pallas_src>

<mosaic_0001>
module attributes {stable_mosaic.version = 11 : i64} {
  func.func @_gem_kernel(%arg0: i32, %arg1: i32, %arg2: memref<1xf32, #tpu.memory_space<smem>>, %arg3: memref<4x16x49xf32, #tpu.memory_space<vmem>>, %arg4: memref<4x16xf32, #tpu.memory_space<vmem>>, %arg5: memref<4x16xf32, #tpu.memory_space<vmem>>) attributes {dimension_semantics = [#tpu.dimension_semantics<parallel>, #tpu.dimension_semantics<arbitrary>], iteration_bounds = array<i64: 1, 1>, scalar_prefetch = 0 : i64, scratch_operands = 1 : i64, tpu.core_type = #tpu.core_type<tc>, window_params = [{transform_indices = @transform_0, window_bounds = array<i64: 1>}, {transform_indices = @transform_1, window_bounds = array<i64: 4, 16, 49>}, {transform_indices = @transform_2, window_bounds = array<i64: 4, 16>}]} {
    %c0_i32 = arith.constant 0 : i32
    %0 = arith.cmpi eq, %arg1, %c0_i32 : i32
    %1 = arith.extui %0 : i1 to i32
    %c0_i32_0 = arith.constant 0 : i32
    %2 = arith.cmpi ne, %1, %c0_i32_0 : i32
    scf.if %2 {
      %cst_11 = arith.constant 0.000000e+00 : f32
      %18 = vector.broadcast %cst_11 : f32 to vector<4x16xf32>
      %c0_12 = arith.constant 0 : index
      %c0_13 = arith.constant 0 : index
      %19 = vector.load %arg5[%c0_12, %c0_13] : memref<4x16xf32, #tpu.memory_space<vmem>>, vector<4x16xf32>
      tpu.vector_store %arg5[%c0_12, %c0_13], %18 {strides = array<i32>} : memref<4x16xf32, #tpu.memory_space<vmem>>, vector<4x16xf32>,
    } else {
    }
    %c0 = arith.constant 0 : index
    %c0_1 = arith.constant 0 : index
    %c0_2 = arith.constant 0 : index
    %3 = vector.load %arg3[%c0, %c0_1, %c0_2] : memref<4x16x49xf32, #tpu.memory_space<vmem>>, vector<4x16x49xf32>
    %cst = arith.constant 9.99999997E-7 : f32
    %4 = vector.broadcast %cst : f32 to vector<4x16x49xf32>
    %5 = arith.maximumf %3, %4 : vector<4x16x49xf32>
    %c0_3 = arith.constant 0 : index
    %6 = memref.load %arg2[%c0_3] : memref<1xf32, #tpu.memory_space<smem>>
    %7 = math.log %5 : vector<4x16x49xf32>
    %8 = vector.broadcast %6 : f32 to vector<4x16x49xf32>
    %9 = arith.mulf %8, %7 : vector<4x16x49xf32>
    %10 = math.exp %9 : vector<4x16x49xf32>
    %c0_4 = arith.constant 0 : index
    %c0_5 = arith.constant 0 : index
    %11 = vector.load %arg5[%c0_4, %c0_5] : memref<4x16xf32, #tpu.memory_space<vmem>>, vector<4x16xf32>
    %cst_6 = arith.constant dense<0.000000e+00> : vector<4x16xf32>
    %12 = vector.multi_reduction <add>, %10, %cst_6 [2] : vector<4x16x49xf32> to vector<4x16xf32>
    %13 = arith.addf %11, %12 : vector<4x16xf32>
    %c0_7 = arith.constant 0 : index
    %c0_8 = arith.constant 0 : index
    %14 = vector.load %arg5[%c0_7, %c0_8] : memref<4x16xf32, #tpu.memory_space<vmem>>, vector<4x16xf32>
    tpu.vector_store %arg5[%c0_7, %c0_8], %13 {strides = array<i32>} : memref<4x16xf32, #tpu.memory_space<vmem>>, vector<4x16xf32>,
    %c0_i32_9 = arith.constant 0 : i32
    %15 = arith.cmpi eq, %arg1, %c0_i32_9 : i32
    %16 = arith.extui %15 : i1 to i32
    %c0_i32_10 = arith.constant 0 : i32
    %17 = arith.cmpi ne, %16, %c0_i32_10 : i32
    scf.if %17 {
      %c0_11 = arith.constant 0 : index
      %c0_12 = arith.constant 0 : index
      %18 = vector.load %arg5[%c0_11, %c0_12] : memref<4x16xf32, #tpu.memory_space<vmem>>, vector<4x16xf32>
      %cst_13 = arith.constant 0.0204081628 : f32
      %19 = vector.broadcast %cst_13 : f32 to vector<4x16xf32>
      %20 = arith.mulf %18, %19 : vector<4x16xf32>
      %c0_14 = arith.constant 0 : index
      %21 = memref.load %arg2[%c0_14] : memref<1xf32, #tpu.memory_space<smem>>
      %cst_15 = arith.constant 1.000000e+00 : f32
      %22 = arith.divf %cst_15, %21 : f32
      %23 = math.log %20 : vector<4x16xf32>
      %24 = vector.broadcast %22 : f32 to vector<4x16xf32>
      %25 = arith.mulf %23, %24 : vector<4x16xf32>
      %26 = math.exp %25 : vector<4x16xf32>
      %c0_16 = arith.constant 0 : index
      %c0_17 = arith.constant 0 : index
      %27 = vector.load %arg4[%c0_16, %c0_17] : memref<4x16xf32, #tpu.memory_space<vmem>>, vector<4x16xf32>
      tpu.vector_store %arg4[%c0_16, %c0_17], %26 {strides = array<i32>} : memref<4x16xf32, #tpu.memory_space<vmem>>, vector<4x16xf32>,
    } else {
    }
    return
  }
  func.func @transform_0(%arg0: i32, %arg1: i32) -> i32 {
    %c0_i32 = arith.constant 0 : i32
    %c0_i32_0 = arith.constant 0 : i32
    return %c0_i32 : i32
  }
  func.func @transform_1(%arg0: i32, %arg1: i32) -> (i32, i32, i32) {
    %c0_i32 = arith.constant 0 : i32
    %c0_i32_0 = arith.constant 0 : i32
    return %arg0, %c0_i32, %arg1 : i32, i32, i32
  }
  func.func @transform_2(%arg0: i32, %arg1: i32) -> (i32, i32) {
    %c0_i32 = arith.constant 0 : i32
    %c0_i32_0 = arith.constant 0 : i32
    return %arg0, %c0_i32 : i32, i32
  }
}

</mosaic_0001>

<llo_original>
// kernel: tpu_custom_call.1
$region0: #{tpu_custom_call.1}
  #allocation0 [shape = 'u32[]', space=smem, size = 0x4, offset = 0x4, fixed_abs, tag = 'smem constant byte address 0x4 - core index']
  #allocation1 [shape = 'u32[144,128]{1,0:T(1,128)}', space=vmem, size = 0x12000, scoped, tag = 'internal scratch']
  #allocation2 [shape = 'f32[4,16]{1,0:T(4,128)}', space=vmem, size = 0x800, scoped, tag = 'scratch operand']
  #allocation3 [shape = 'f32[1]{0:T(128)S(6)}', space=smem, size = 0x200, scoped, tag = 'scoped memory for tpu_custom_call.1']
  %s0 = inlined_call_operand.<no memory space> [shape: f32[1], index: 0, kind: input, shape index: {}]
  %s1 = inlined_call_operand.hbm [shape: f32[4,16,49], index: 1, kind: input, shape index: {}]
  %s2 = inlined_call_operand.hbm [shape: f32[4,16], index: 2, kind: output, shape index: {}]
  %s3 = sld [smem:[#allocation0]]
  $region30: #{tpu_custom_call.1} parent=0
    _
  %s5 = ssub.s32 1, %s3
  %s6 = scalar_select 0, %s5, %s3
  %7 = sst [smem:[#allocation3]] %s0
  $region1: #{tpu_custom_call.1} parent=0
    #allocation4 [shape = 'u8[32768]{0}', space=vmem, size = 0x8000, scoped, tag = 'input window, operand 1, single buffered']
    #allocation5 [shape = 's32[1]{0}', space=sflag, size = 0x4, scoped, tag = 'scoped memory for tpu_custom_call.1']
    #allocation6 [shape = 's32[1]{0}', space=sflag, size = 0x4, scoped, tag = 'scoped memory for tpu_custom_call.1']
    #allocation7 [shape = 'u8[2048]{0}', space=vmem, size = 0x800, scoped, tag = 'output window, operand 0, single buffered']
    %8 = vsyncpa [#allocation5], 0
    %9 = vsyncpa [#allocation6], 0
    // Predicated region
    $region2: #{tpu_custom_call.1} parent=1 // pred_check
      _
    $region3: #{tpu_custom_call.1} parent=1 // pred_check_branch
      %11 = sbr.rel (0) target = $region5
    $region4: #{tpu_custom_call.1} parent=1 // pred_region
      _
    $region5: #{tpu_custom_call.1} parent=1 // pred_fallthru
      _
    // Predicated region
    $region6: #{tpu_custom_call.1} parent=1 // pred_check
      _
    $region7: #{tpu_custom_call.1} parent=1 // pred_check_branch
      %13 = sbr.rel (0) target = $region9
    $region8: #{tpu_custom_call.1} parent=1 // pred_region
      %s15 = ssub.s32 1024, 1024
      %16 = vsyncadd [#allocation5], %s15
      %s17 = sshll.u32 [#allocation4], 4
      %s18 = int_to_ptr.vmem [resolvable:$true] %s17
      %23 = dma.hbm_to_vmem [thread:$0]  %s1, 1024, %s18, [#allocation5], 128, 128, 8
    $region9: #{tpu_custom_call.1} parent=1 // pred_fallthru
      _
    // Predicated region
    $region10: #{tpu_custom_call.1} parent=1 // pred_check
      _
    $region11: #{tpu_custom_call.1} parent=1 // pred_check_branch
      %25 = sbr.rel (0) target = $region13
    $region12: #{tpu_custom_call.1} parent=1 // pred_region
      %26 = dma.done [#allocation5], 1024
    $region13: #{tpu_custom_call.1} parent=1 // pred_fallthru
      _
    %p27 = scmp.eq.s32.totalorder 0, 0
    // Predicated region
    $region14: #{tpu_custom_call.1} parent=1 // pred_check
      %p28 = pneg %p27
    $region15: #{tpu_custom_call.1} parent=1 // pred_check_branch
      %30 = sbr.rel (%p28) target = $region17
    $region16: #{tpu_custom_call.1} parent=1 // pred_region
      %vm31 = vcmask 125952
      %32 = vst.msk [vmem:[#allocation2] sm:$0xf] %vm31, 0.0
    $region17: #{tpu_custom_call.1} parent=1 // pred_fallthru
      _
    %v33 = vld [vmem:[#allocation4] sm:$0xff]
    %v34 = vld [vmem:[#allocation4 + $0x8] sm:$0xff]
    %v35 = vld [vmem:[#allocation4 + $0x10] sm:$0xff]
    %v36 = vld [vmem:[#allocation4 + $0x18] sm:$0xff]
    %v37 = vld [vmem:[#allocation4 + $0x20] sm:$0xff]
    %v38 = vld [vmem:[#allocation4 + $0x28] sm:$0xff]
    %v39 = vld [vmem:[#allocation4 + $0x30] sm:$0xff]
    %v40 = vld [vmem:[#allocation4 + $0x38] sm:$0xff]
    %v41 = vmax.f32 %v33, 1e-06
    %v42 = vmax.f32 %v34, 1e-06
    %v43 = vmax.f32 %v35, 1e-06
    %v44 = vmax.f32 %v36, 1e-06
    %v45 = vmax.f32 %v37, 1e-06
    %v46 = vmax.f32 %v38, 1e-06
    %v47 = vmax.f32 %v39, 1e-06
    %v48 = vmax.f32 %v40, 1e-06
    %s49 = sld [smem:[#allocation3]]
    %v50 = vlog2.pop %v41
    %v51 = vmul.f32 %v50, 0.6931472
    %v52 = vlog2.pop %v42
    %v53 = vmul.f32 %v52, 0.6931472
    %v54 = vlog2.pop %v43
    %v55 = vmul.f32 %v54, 0.6931472
    %v56 = vlog2.pop %v44
    %v57 = vmul.f32 %v56, 0.6931472
    %v58 = vlog2.pop %v45
    %v59 = vmul.f32 %v58, 0.6931472
    %v60 = vlog2.pop %v46
    %v61 = vmul.f32 %v60, 0.6931472
    %v62 = vlog2.pop %v47
    %v63 = vmul.f32 %v62, 0.6931472
    %v64 = vlog2.pop %v48
    %v65 = vmul.f32 %v64, 0.6931472
    %v66 = vstv %s49
    %v67 = vmul.f32 %v66, %v51
    %v68 = vmul.f32 %v66, %v53
    %v69 = vmul.f32 %v66, %v55
    %v70 = vmul.f32 %v66, %v57
    %v71 = vmul.f32 %v66, %v59
    %v72 = vmul.f32 %v66, %v61
    %v73 = vmul.f32 %v66, %v63
    %v74 = vmul.f32 %v66, %v65
    %v75 = vmul.f32 %v67, 1.442695
    %v76 = vpow.pop %v75
    %v77 = vmul.f32 %v68, 1.442695
    %v78 = vpow.pop %v77
    %v79 = vmul.f32 %v69, 1.442695
    %v80 = vpow.pop %v79
    %v81 = vmul.f32 %v70, 1.442695
    %v82 = vpow.pop %v81
    %v83 = vmul.f32 %v71, 1.442695
    %v84 = vpow.pop %v83
    %v85 = vmul.f32 %v72, 1.442695
    %v86 = vpow.pop %v85
    %v87 = vmul.f32 %v73, 1.442695
    %v88 = vpow.pop %v87
    %v89 = vmul.f32 %v74, 1.442695
    %v90 = vpow.pop %v89
    %v91 = vld [vmem:[#allocation2] sm:$0xf]
    %vm92 = vcmask 400384
    %v93 = vsel %vm92, %v76, 0.0
    %94 = vadd.xlane.f32.xlu0 %v93
    %v95 = vpop.xlane.xlu0 %94
    %v96 = vsel %vm92, %v78, 0.0
    %97 = vadd.xlane.f32.xlu0 %v96
    %v98 = vpop.xlane.xlu0 %97
    %v99 = vsel %vm92, %v80, 0.0
    %100 = vadd.xlane.f32.xlu0 %v99
    %v101 = vpop.xlane.xlu0 %100
    %v102 = vsel %vm92, %v82, 0.0
    %103 = vadd.xlane.f32.xlu0 %v102
    %v104 = vpop.xlane.xlu0 %103
    %v105 = vsel %vm92, %v84, 0.0
    %106 = vadd.xlane.f32.xlu0 %v105
    %v107 = vpop.xlane.xlu0 %106
    %v108 = vsel %vm92, %v86, 0.0
    %109 = vadd.xlane.f32.xlu0 %v108
    %v110 = vpop.xlane.xlu0 %109
    %v111 = vsel %vm92, %v88, 0.0
    %112 = vadd.xlane.f32.xlu0 %v111
    %v113 = vpop.xlane.xlu0 %112
    %v114 = vsel %vm92, %v90, 0.0
    %115 = vadd.xlane.f32.xlu0 %v114
    %v116 = vpop.xlane.xlu0 %115
    %v125 = vlaneseq
    %v126 = vand.u32 %v125, 127
    %v127 = vlaneseq
    %v128 = vshrl.u32 %v127, 7
    %v129 = vsub.s32 %v126, %v128
    %v130 = vrot.slane %v95, %v129
    %v131 = vadd.s32 %v126, 4294967288
    %v132 = vlaneseq
    %v133 = vshrl.u32 %v132, 7
    %v134 = vsub.s32 %v131, %v133
    %v135 = vrot.slane %v98, %v134
    %vm136 = vcmask 130112
    %v137 = vsel %vm136, %v135, %v130
    %v138 = vlaneseq
    %v139 = vshrl.u32 %v138, 7
    %v140 = vsub.s32 %v126, %v139
    %v141 = vrot.slane %v101, %v140
    %v142 = vlaneseq
    %v143 = vshrl.u32 %v142, 7
    %v144 = vsub.s32 %v131, %v143
    %v145 = vrot.slane %v104, %v144
    %v146 = vsel %vm136, %v145, %v141
    %v147 = vlaneseq
    %v148 = vshrl.u32 %v147, 7
    %v149 = vsub.s32 %v126, %v148
    %v150 = vrot.slane %v107, %v149
    %v151 = vlaneseq
    %v152 = vshrl.u32 %v151, 7
    %v153 = vsub.s32 %v131, %v152
    %v154 = vrot.slane %v110, %v153
    %v155 = vsel %vm136, %v154, %v150
    %v156 = vlaneseq
    %v157 = vshrl.u32 %v156, 7
    %v158 = vsub.s32 %v126, %v157
    %v159 = vrot.slane %v113, %v158
    %v160 = vlaneseq
    %v161 = vshrl.u32 %v160, 7
    %v162 = vsub.s32 %v131, %v161
    %v163 = vrot.slane %v116, %v162
    %v164 = vsel %vm136, %v163, %v159
    %vm165 = vcmask 1041409
    %v166 = vsel %vm165, %v146, %v137
    %vm167 = vcmask 1042434
    %v168 = vsel %vm167, %v155, %v166
    %vm169 = vcmask 1043459
    %v170 = vsel %vm169, %v164, %v168
    %v172 = vadd.f32 %v91, %v170
    %vm173 = vcmask 125952
    %174 = vst.msk [vmem:[#allocation2] sm:$0xf] %vm173, %v172
    // Predicated region
    $region18: #{tpu_custom_call.1} parent=1 // pred_check
      %p175 = pneg %p27
    $region19: #{tpu_custom_call.1} parent=1 // pred_check_branch
      %177 = sbr.rel (%p175) target = $region21
    $region20: #{tpu_custom_call.1} parent=1 // pred_region
      %v178 = vld [vmem:[#allocation2] sm:$0xf]
      %v179 = vmul.f32 %v178, 0.020408163
      %s180 = sld [smem:[#allocation3]]
      %v181 = vstv %s180
      %v182 = vrcp.pop %v181
      %s183 = vtos %v182
      %v184 = vlog2.pop %v179
      %v185 = vmul.f32 %v184, 0.6931472
      %v186 = vstv %s183
      %v187 = vmul.f32 %v185, %v186
      %v188 = vmul.f32 %v187, 1.442695
      %v189 = vpow.pop %v188
      %190 = vst.msk [vmem:[#allocation7] sm:$0xf] %vm173, %v189
    $region21: #{tpu_custom_call.1} parent=1 // pred_fallthru
      _
    // Predicated region
    $region22: #{tpu_custom_call.1} parent=1 // pred_check
      _
    $region23: #{tpu_custom_call.1} parent=1 // pred_check_branch
      %192 = sbr.rel (0) target = $region25
    $region24: #{tpu_custom_call.1} parent=1 // pred_region
      %s194 = ssub.s32 64, 64
      %195 = vsyncadd [#allocation6], %s194
      %s197 = sshll.u32 [#allocation7], 4
      %s198 = int_to_ptr.vmem [resolvable:$true] %s197
      %200 = dma.vmem_to_hbm [thread:$0]  %s198, 64, %s2, [#allocation6]
    $region25: #{tpu_custom_call.1} parent=1 // pred_fallthru
      _
    // Predicated region
    $region26: #{tpu_custom_call.1} parent=1 // pred_check
      _
    $region27: #{tpu_custom_call.1} parent=1 // pred_check_branch
      %202 = sbr.rel (0) target = $region29
    $region28: #{tpu_custom_call.1} parent=1 // pred_region
      %203 = dma.done [#allocation6], 64
    $region29: #{tpu_custom_call.1} parent=1 // pred_fallthru
      _
    %204 = vsyncpa [#allocation5], 1
    %205 = vsyncpa [#allocation6], 1

</llo_original>
